<compile_context>
chip_gen: v7x
topology: tpu7x:2x2x1
jax: 0.10.0
libtpu: 0.0.40
codegen_flags: <defaults>
</compile_context>

<pallas_src>
import math

import jax
import jax.numpy as jnp
from jax.experimental import pallas as pl
from jax.experimental.pallas import tpu as pltpu

D_MODEL = 128  # d_model (512 in the original; kept small & lane-aligned here)


# ---------------------------------------------------------------------------
# Tile-size helpers
# ---------------------------------------------------------------------------
def _pick_tk(F_pad):
    """Largest lane-aligned K tile dividing F_pad (F_pad is a multiple of 128)."""
    for tk in (2048, 1024, 512, 256, 128):
        if F_pad % tk == 0:
            return tk
    return 128  # unreachable for F_pad % 128 == 0


def _pick_tb(B, n, max_rows=512):
    """Batches per grid step.

    Requirements: tb divides B, tb*n <= max_rows, and the resulting block shapes are
    (8,128)-legal (tb % 8 == 0 or tb == B; (tb*n) % 8 == 0 or tb*n == B*n).
    Prefers >= 2 batch-groups so both v7x TensorCores get work on the parallel axis.
    """
    cands = []
    for tb in range(1, B + 1):
        if B % tb:
            continue
        rows = tb * n
        if rows > max_rows:
            continue
        ok_out = (tb % 8 == 0) or (tb == B)
        ok_x = (rows % 8 == 0) or (rows == B * n)
        if ok_out and ok_x:
            cands.append(tb)
    if not cands:
        return B  # full-dim blocks are always lowering-legal
    multi = [t for t in cands if B // t >= 2]
    return max(multi) if multi else max(cands)


# ---------------------------------------------------------------------------
# Fused kernel: K-tiled backbone matmul + vectorized attention-pooling epilogue
# ---------------------------------------------------------------------------
def _make_fused_kernel(n, tb, tk, with_mask, w_resident, compute_dtype):
    R = tb * n  # rows (frames) per batch-group block

    def kernel(*refs):
        if with_mask:
            x_ref, w_ref, b_ref, q0_ref, m_ref, o_ref, acc_ref = refs
        else:
            x_ref, w_ref, b_ref, q0_ref, o_ref, acc_ref = refs
            m_ref = None

        k = pl.program_id(1)

        @pl.when(k == 0)
        def _init():
            acc_ref[...] = jnp.zeros_like(acc_ref)

        # (R, tk) @ (tk, D) accumulated in f32; x tile cast in-kernel (no wrapper pass).
        x_tile = x_ref[...].astype(compute_dtype)
        if w_resident:
            off = pl.multiple_of(k * tk, tk)
            w_tile = w_ref[pl.ds(off, tk), :]       # slice of the VMEM-resident weight
        else:
            w_tile = w_ref[...]                      # streamed K-tile
        acc_ref[...] += jnp.dot(x_tile, w_tile, preferred_element_type=jnp.float32)

        @pl.when(k == pl.num_programs(1) - 1)
        def _epilogue():
            acc = acc_ref[...]                       # (R, D) f32 features (bias-free)
            q0 = q0_ref[...]                         # (1, D) f32, pre-scaled by 1/sqrt(D)

            # Scores for the whole block in one lane-reduce.  The bias is omitted: it is
            # a per-batch constant shift of the scores and cancels in softmax.
            s = jnp.sum(acc * q0, axis=-1, keepdims=True) + 1e-9      # (R, 1)
            if with_mask:
                s = jnp.where(m_ref[...] == 0.0, -1e9, s)

            # Softmax is invariant to any per-batch constant shift; the global max over
            # the block bounds every batch's max, so exp never overflows.
            gmax = jnp.max(s, keepdims=True)                          # (1, 1)
            e = jnp.exp(s - gmax)                                     # (R, 1)

            # Block-diagonal selector: sel[t, j] = 1 iff frame-row j belongs to batch t.
            row = jax.lax.broadcasted_iota(jnp.int32, (tb, R), 0)
            col = jax.lax.broadcasted_iota(jnp.int32, (tb, R), 1)
            start = row * n
            sel = ((col >= start) & (col < start + n)).astype(jnp.float32)

            num = jnp.dot(sel, e * acc, preferred_element_type=jnp.float32)  # (tb, D)
            den = jnp.dot(sel, e, preferred_element_type=jnp.float32)        # (tb, 1)

            # Weights sum to 1, so the backbone bias is added once to the pooled output.
            o_ref[...] = (num / den + b_ref[...]).astype(o_ref.dtype)  # one full store

    return kernel


def fused_backbone_attention(x_flat, n, w, b, q0, mask=None, *, compute_dtype=None):
    BN, F = x_flat.shape
    Fw, D = w.shape
    assert Fw == F
    B = BN // n
    assert B * n == BN

    if compute_dtype is None:
        compute_dtype = x_flat.dtype

    # Pad the contraction dim to a multiple of 128 with zeros (result unchanged).
    F_pad = ((F + 127) // 128) * 128
    if F_pad != F:
        x_flat = jnp.pad(x_flat, ((0, 0), (0, F_pad - F)))
        w = jnp.pad(w, ((0, F_pad - F), (0, 0)))

    tk = _pick_tk(F_pad)
    tb = _pick_tb(B, n)
    R = tb * n

    # Only the (small, reused) weight is cast host-side; x is cast per-tile in-kernel.
    w = w.astype(compute_dtype)
    b2 = jnp.asarray(b, jnp.float32).reshape(1, D)
    q0s = (jnp.asarray(q0, jnp.float32) / math.sqrt(float(D))).reshape(1, D)

    with_mask = mask is not None
    itemsize = jnp.dtype(compute_dtype).itemsize
    # Keep W fully VMEM-resident (fetched once total) when small enough; the 4 MiB
    # budget leaves room for double-buffering on every generation (incl. v7x 64 MiB).
    w_resident = F_pad * D * itemsize <= 4 * 1024 * 1024

    if w_resident:
        w_spec = pl.BlockSpec((F_pad, D), lambda g, k: (0, 0))   # constant block
    else:
        w_spec = pl.BlockSpec((tk, D), lambda g, k: (k, 0))      # streamed K-tiles

    in_specs = [
        pl.BlockSpec((R, tk), lambda g, k: (g, k)),   # x rows for this batch-group
        w_spec,
        pl.BlockSpec((1, D), lambda g, k: (0, 0)),    # bias (resident)
        pl.BlockSpec((1, D), lambda g, k: (0, 0)),    # q0 * 1/sqrt(D) (resident)
    ]
    inputs = [x_flat, w, b2, q0s]
    if with_mask:
        in_specs.append(pl.BlockSpec((R, 1), lambda g, k: (g, 0)))
        inputs.append(jnp.asarray(mask, jnp.float32).reshape(BN, 1))

    kernel = _make_fused_kernel(n, tb, tk, with_mask, w_resident, compute_dtype)

    return pl.pallas_call(
        kernel,
        out_shape=jax.ShapeDtypeStruct((B, D), jnp.float32),
        grid_spec=pltpu.PrefetchScalarGridSpec(
            num_scalar_prefetch=0,
            grid=(B // tb, F_pad // tk),
            in_specs=in_specs,
            out_specs=pl.BlockSpec((tb, D), lambda g, k: (g, 0)),
            scratch_shapes=[pltpu.VMEM((R, D), jnp.float32)],
        ),
        compiler_params=pltpu.CompilerParams(
            dimension_semantics=("parallel", "arbitrary"),
            vmem_limit_bytes=32 * 1024 * 1024,
        ),
    )(*inputs)


# ---------------------------------------------------------------------------
# Full Aggregator forward
# ---------------------------------------------------------------------------
def aggregator_forward(x, params, mask=None, *, compute_dtype=None):
    B, n, c, h, w = x.shape
    x_flat = x.reshape(B * n, c * h * w)
    return fused_backbone_attention(
        x_flat, n, params["w_bb"], params["b_bb"], params["q0"],
        mask=mask, compute_dtype=compute_dtype,
    )


# ---------------------------------------------------------------------------
# Pure-JAX reference for validation
# ---------------------------------------------------------------------------
def aggregator_reference(x, params, mask=None):
    B, n, c, h, w = x.shape
    D = params["w_bb"].shape[1]
    hp = jax.lax.Precision.HIGHEST
    feats = (
        jnp.dot(x.reshape(B * n, -1).astype(jnp.float32),
                params["w_bb"].astype(jnp.float32), precision=hp)
        + params["b_bb"]
    )
    feats = feats.reshape(B, n, D)
    scores = jnp.einsum("bnd,d->bn", feats, params["q0"], precision=hp)
    scores = scores / math.sqrt(D) + 1e-9
    if mask is not None:
        scores = jnp.where(mask == 0, -1e9, scores)
    weights = jax.nn.softmax(scores, axis=-1)
    return jnp.einsum("bn,bnd->bd", weights, feats, precision=hp)


if __name__ == "__main__":
    key = jax.random.PRNGKey(0)
    k_x, k_w, k_q = jax.random.split(key, 3)

    # Small shapes: batch=2, num_frames=8, NCHW frames (3, 16, 16)
    B, n, c, h, w = 2, 8, 3, 16, 16
    F = c * h * w

    x = jax.random.normal(k_x, (B, n, c, h, w), dtype=jnp.float32)

    params = {
        "w_bb": 0.02 * jax.random.normal(k_w, (F, D_MODEL), dtype=jnp.float32),
        "b_bb": jnp.zeros((1, D_MODEL), dtype=jnp.float32),
        # original init is zeros; use small deterministic random values so the
        # softmax path is exercised non-trivially
        "q0": 0.02 * jax.random.normal(k_q, (D_MODEL,), dtype=jnp.float32),
    }

    # 1) mask=None path (static no-mask kernel variant), f32 compute
    out = jax.block_until_ready(aggregator_forward(x, params, mask=None))
    ref = aggregator_reference(x, params, mask=None)
    assert out.shape == (B, D_MODEL)
    assert jnp.allclose(out, ref, rtol=5e-3, atol=5e-3), "mismatch vs reference (no mask)"

    # 2) masked path (static masked kernel variant), f32 compute
    mask = jnp.array(
        [[1, 1, 1, 1, 1, 0, 0, 0],
         [1, 1, 1, 1, 1, 1, 1, 0]], dtype=jnp.float32)
    out_m = jax.block_until_ready(aggregator_forward(x, params, mask=mask))
    ref_m = aggregator_reference(x, params, mask=mask)
    assert jnp.allclose(out_m, ref_m, rtol=5e-3, atol=5e-3), "mismatch vs reference (mask)"

    # 3) bf16 compute path: x tiles cast in-kernel, W cast host-side; f32 accumulation
    #    and f32 softmax epilogue (v5e-safe).
    out_bf = jax.block_until_ready(
        aggregator_forward(x, params, mask=None, compute_dtype=jnp.bfloat16))
    assert jnp.allclose(out_bf, ref, rtol=5e-2, atol=5e-2), "mismatch vs reference (bf16)"

    print("KERNEL_OK")
</pallas_src>

<mosaic_0001>
module attributes {stable_mosaic.version = 11 : i64} {
  func.func @kernel(%arg0: i32, %arg1: i32, %arg2: memref<16x256xf32, #tpu.memory_space<vmem>>, %arg3: memref<768x128xf32, #tpu.memory_space<vmem>>, %arg4: memref<1x128xf32, #tpu.memory_space<vmem>>, %arg5: memref<1x128xf32, #tpu.memory_space<vmem>>, %arg6: memref<2x128xf32, #tpu.memory_space<vmem>>, %arg7: memref<16x128xf32, #tpu.memory_space<vmem>>) attributes {dimension_semantics = [#tpu.dimension_semantics<parallel>, #tpu.dimension_semantics<arbitrary>], iteration_bounds = array<i64: 1, 3>, scalar_prefetch = 0 : i64, scratch_operands = 1 : i64, tpu.core_type = #tpu.core_type<tc>, window_params = [{transform_indices = @transform_0, window_bounds = array<i64: 16, 256>}, {pipeline_mode = #tpu.pipeline_mode<synchronous>, transform_indices = @transform_1, window_bounds = array<i64: 768, 128>}, {pipeline_mode = #tpu.pipeline_mode<synchronous>, transform_indices = @transform_2, window_bounds = array<i64: 1, 128>}, {pipeline_mode = #tpu.pipeline_mode<synchronous>, transform_indices = @transform_3, window_bounds = array<i64: 1, 128>}, {transform_indices = @transform_4, window_bounds = array<i64: 2, 128>}]} {
    %c0_i32 = arith.constant 0 : i32
    %0 = arith.cmpi eq, %arg1, %c0_i32 : i32
    %1 = arith.extui %0 : i1 to i32
    %c0_i32_0 = arith.constant 0 : i32
    %2 = arith.cmpi ne, %1, %c0_i32_0 : i32
    scf.if %2 {
      %cst_8 = arith.constant 0.000000e+00 : f32
      %15 = vector.broadcast %cst_8 : f32 to vector<16x128xf32>
      %c0_9 = arith.constant 0 : index
      %c0_10 = arith.constant 0 : index
      %16 = vector.load %arg7[%c0_9, %c0_10] : memref<16x128xf32, #tpu.memory_space<vmem>>, vector<16x128xf32>
      tpu.vector_store %arg7[%c0_9, %c0_10], %15 {strides = array<i32>} : memref<16x128xf32, #tpu.memory_space<vmem>>, vector<16x128xf32>,
    } else {
    }
    %c0 = arith.constant 0 : index
    %c0_1 = arith.constant 0 : index
    %3 = vector.load %arg2[%c0, %c0_1] : memref<16x256xf32, #tpu.memory_space<vmem>>, vector<16x256xf32>
    %c256_i32 = arith.constant 256 : i32
    %4 = arith.muli %arg1, %c256_i32 : i32
    %5 = tpu.assume_multiple %4, 256 : i32
    %6 = arith.index_cast %5 : i32 to index
    %c0_2 = arith.constant 0 : index
    %7 = vector.load %arg3[%6, %c0_2] : memref<768x128xf32, #tpu.memory_space<vmem>>, vector<256x128xf32>
    %c0_3 = arith.constant 0 : index
    %c0_4 = arith.constant 0 : index
    %8 = vector.load %arg7[%c0_3, %c0_4] : memref<16x128xf32, #tpu.memory_space<vmem>>, vector<16x128xf32>
    %cst = arith.constant dense<0.000000e+00> : vector<16x128xf32>
    %9 = tpu.matmul %3, %7, %cst {dimension_numbers = #tpu.dot_dimension_numbers<[1], [0], [0], [1], [0, 0, 1, 1], [], []>} : vector<16x256xf32>, vector<256x128xf32>, vector<16x128xf32> -> vector<16x128xf32>
    %10 = arith.addf %8, %9 : vector<16x128xf32>
    %c0_5 = arith.constant 0 : index
    %c0_6 = arith.constant 0 : index
    %11 = vector.load %arg7[%c0_5, %c0_6] : memref<16x128xf32, #tpu.memory_space<vmem>>, vector<16x128xf32>
    tpu.vector_store %arg7[%c0_5, %c0_6], %10 {strides = array<i32>} : memref<16x128xf32, #tpu.memory_space<vmem>>, vector<16x128xf32>,
    %c2_i32 = arith.constant 2 : i32
    %12 = arith.cmpi eq, %arg1, %c2_i32 : i32
    %13 = arith.extui %12 : i1 to i32
    %c0_i32_7 = arith.constant 0 : i32
    %14 = arith.cmpi ne, %13, %c0_i32_7 : i32
    scf.if %14 {
      %c0_8 = arith.constant 0 : index
      %c0_9 = arith.constant 0 : index
      %15 = vector.load %arg7[%c0_8, %c0_9] : memref<16x128xf32, #tpu.memory_space<vmem>>, vector<16x128xf32>
      %c0_10 = arith.constant 0 : index
      %c0_11 = arith.constant 0 : index
      %16 = vector.load %arg5[%c0_10, %c0_11] : memref<1x128xf32, #tpu.memory_space<vmem>>, vector<1x128xf32>
      %17 = vector.broadcast %16 : vector<1x128xf32> to vector<16x128xf32>
      %18 = arith.mulf %15, %17 : vector<16x128xf32>
      %cst_12 = arith.constant dense<0.000000e+00> : vector<16xf32>
      %19 = vector.multi_reduction <add>, %18, %cst_12 [1] : vector<16x128xf32> to vector<16xf32>
      %20 = vector.shape_cast %19 : vector<16xf32> to vector<16x1xf32>
      %cst_13 = arith.constant 9.99999971E-10 : f32
      %21 = vector.broadcast %cst_13 : f32 to vector<16x1xf32>
      %22 = arith.addf %20, %21 : vector<16x1xf32>
      %23 = vector.shape_cast %22 : vector<16x1xf32> to vector<1x16x1xf32>
      %cst_14 = arith.constant dense<0xFF800000> : vector<1xf32>
      %24 = vector.multi_reduction <maximumf>, %23, %cst_14 [1, 2] : vector<1x16x1xf32> to vector<1xf32>
      %25 = vector.shape_cast %24 : vector<1xf32> to vector<1x1x1xf32>
      %26 = vector.extract %25[0, 0, 0] : f32 from vector<1x1x1xf32>
      %27 = vector.broadcast %26 : f32 to vector<1x1xf32>
      %28 = vector.broadcast %27 : vector<1x1xf32> to vector<16x1xf32>
      %29 = arith.subf %22, %28 : vector<16x1xf32>
      %30 = math.exp %29 : vector<16x1xf32>
      %31 = tpu.iota {dimensions = array<i32: 0>} : vector<2x16xi32>
      %32 = tpu.iota {dimensions = array<i32: 1>} : vector<2x16xi32>
      %c8_i32 = arith.constant 8 : i32
      %33 = vector.broadcast %c8_i32 : i32 to vector<2x16xi32>
      %34 = arith.muli %31, %33 : vector<2x16xi32>
      %35 = arith.cmpi sge, %32, %34 : vector<2x16xi32>
      %c8_i32_15 = arith.constant 8 : i32
      %36 = vector.broadcast %c8_i32_15 : i32 to vector<2x16xi32>
      %37 = arith.addi %34, %36 : vector<2x16xi32>
      %38 = arith.cmpi slt, %32, %37 : vector<2x16xi32>
      %39 = arith.andi %35, %38 : vector<2x16xi1>
      %40 = arith.extui %39 : vector<2x16xi1> to vector<2x16xi32>
      %41 = arith.sitofp %40 : vector<2x16xi32> to vector<2x16xf32>
      %42 = vector.broadcast %30 : vector<16x1xf32> to vector<16x128xf32>
      %43 = arith.mulf %42, %15 : vector<16x128xf32>
      %cst_16 = arith.constant dense<0.000000e+00> : vector<2x128xf32>
      %44 = tpu.matmul %41, %43, %cst_16 {dimension_numbers = #tpu.dot_dimension_numbers<[1], [0], [0], [1], [0, 0, 1, 1], [], []>} : vector<2x16xf32>, vector<16x128xf32>, vector<2x128xf32> -> vector<2x128xf32>
      %cst_17 = arith.constant dense<0.000000e+00> : vector<2x1xf32>
      %45 = tpu.matmul %41, %30, %cst_17 {dimension_numbers = #tpu.dot_dimension_numbers<[1], [0], [0], [1], [0, 0, 1, 1], [], []>} : vector<2x16xf32>, vector<16x1xf32>, vector<2x1xf32> -> vector<2x1xf32>
      %46 = vector.broadcast %45 : vector<2x1xf32> to vector<2x128xf32>
      %47 = arith.divf %44, %46 : vector<2x128xf32>
      %c0_18 = arith.constant 0 : index
      %c0_19 = arith.constant 0 : index
      %48 = vector.load %arg4[%c0_18, %c0_19] : memref<1x128xf32, #tpu.memory_space<vmem>>, vector<1x128xf32>
      %49 = vector.broadcast %48 : vector<1x128xf32> to vector<2x128xf32>
      %50 = arith.addf %47, %49 : vector<2x128xf32>
      %c0_20 = arith.constant 0 : index
      %c0_21 = arith.constant 0 : index
      %51 = vector.load %arg6[%c0_20, %c0_21] : memref<2x128xf32, #tpu.memory_space<vmem>>, vector<2x128xf32>
      tpu.vector_store %arg6[%c0_20, %c0_21], %50 {strides = array<i32>} : memref<2x128xf32, #tpu.memory_space<vmem>>, vector<2x128xf32>,
    } else {
    }
    return
  }
  func.func @transform_0(%arg0: i32, %arg1: i32) -> (i32, i32) {
    %c0_i32 = arith.constant 0 : i32
    return %arg0, %arg1 : i32, i32
  }
  func.func @transform_1(%arg0: i32, %arg1: i32) -> (i32, i32) {
    %c0_i32 = arith.constant 0 : i32
    %c0_i32_0 = arith.constant 0 : i32
    %c0_i32_1 = arith.constant 0 : i32
    return %c0_i32, %c0_i32_0 : i32, i32
  }
  func.func @transform_2(%arg0: i32, %arg1: i32) -> (i32, i32) {
    %c0_i32 = arith.constant 0 : i32
    %c0_i32_0 = arith.constant 0 : i32
    %c0_i32_1 = arith.constant 0 : i32
    return %c0_i32, %c0_i32_0 : i32, i32
  }
  func.func @transform_3(%arg0: i32, %arg1: i32) -> (i32, i32) {
    %c0_i32 = arith.constant 0 : i32
    %c0_i32_0 = arith.constant 0 : i32
    %c0_i32_1 = arith.constant 0 : i32
    return %c0_i32, %c0_i32_0 : i32, i32
  }
  func.func @transform_4(%arg0: i32, %arg1: i32) -> (i32, i32) {
    %c0_i32 = arith.constant 0 : i32
    %c0_i32_0 = arith.constant 0 : i32
    return %arg0, %c0_i32 : i32, i32
  }
}

</mosaic_0001>

<llo_original>
// kernel: tpu_custom_call.1
$region0: #{tpu_custom_call.1}
  #allocation0 [shape = 'u32[]', space=smem, size = 0x4, offset = 0x4, fixed_abs, tag = 'smem constant byte address 0x4 - core index']
  #allocation1 [shape = 'u32[144,128]{1,0:T(1,128)}', space=vmem, size = 0x12000, scoped, tag = 'internal scratch']
  #allocation2 [shape = 'f32[16,128]{1,0:T(8,128)}', space=vmem, size = 0x2000, scoped, tag = 'scratch operand']
  %s0 = inlined_call_operand.hbm [shape: f32[16,768], index: 0, kind: input, shape index: {}]
  %s1 = inlined_call_operand.hbm [shape: f32[768,128], index: 1, kind: input, shape index: {}]
  %s2 = inlined_call_operand.vmem [shape: f32[1,128], index: 2, kind: input, shape index: {}]
  %s3 = inlined_call_operand.vmem [shape: f32[1,128], index: 3, kind: input, shape index: {}]
  %s4 = inlined_call_operand.hbm [shape: f32[2,128], index: 4, kind: output, shape index: {}]
  %s5 = sld [smem:[#allocation0]]
  $region65: #{tpu_custom_call.1} parent=0
    _
  %s7 = ssub.s32 1, %s5
  %s8 = scalar_select 0, %s7, %s5
  $region1: #{tpu_custom_call.1} parent=0
    #allocation3 [shape = 'u8[32768]{0}', space=vmem, size = 0x8000, scoped, tag = 'input window, operand 0']
    #allocation4 [shape = 's32[2]{0}', space=sflag, size = 0x8, scoped, tag = 'scoped memory for tpu_custom_call.1']
    #allocation5 [shape = 's32[2]{0}', space=sflag, size = 0x8, scoped, tag = 'scoped memory for tpu_custom_call.1']
    #allocation6 [shape = 'u8[393216]{0}', space=vmem, size = 0x60000, scoped, tag = 'input window, operand 1, single buffered']
    #allocation7 [shape = 's32[1]{0}', space=sflag, size = 0x4, scoped, tag = 'scoped memory for tpu_custom_call.1']
    #allocation8 [shape = 'u8[1024]{0}', space=vmem, size = 0x400, scoped, tag = 'output window, operand 0, single buffered']
    %9 = vsyncpa [#allocation4], 0
    %s10 = scalar_lea.sflag [#allocation4], 1
    %11 = vsyncpa %s10, 0
    %12 = vsyncpa [#allocation7], 0
    %13 = vsyncpa [#allocation5], 0
    loop: start=0, step=1, limit=5
    $region2: #{tpu_custom_call.1} parent=1 // loop_pre_header
      _
    $region3: #{tpu_custom_call.1} parent=1 // loop_header
      %s15 = sphi 0, %s19
      %p16 = scmp.ge.s32.totalorder %s15, 5
      %s22 = sphi 0, %s34
      %s23 = sphi 0, %s30
      %s24 = sphi 0, %s22
      %s25 = sphi 0, %s23
      %s26 = sphi 0, %s24
      %s27 = sphi 0, %s25
      %s39 = sphi 0, %s41
      %s42 = sphi 0, %s39
      %s43 = sphi 0, %s42
      %s59 = sphi 0, %s43
      %s63 = sphi 0, %s63
      %s65 = sphi 0, %s63
      %s66 = sphi 0, %s65
      %s80 = sphi 0, %s66
      %s84 = sphi 0, %s84
      %s86 = sphi 0, %s84
      %s87 = sphi 0, %s86
      %s101 = sphi 0, %s87
      %s105 = sphi 0, %s105
      %s107 = sphi 0, %s105
      %s108 = sphi 0, %s107
      %s122 = sphi 0, %s108
      %s128 = sphi 0, %s130
      %s131 = sphi 0, %s128
      %s132 = sphi 0, %s131
      %s148 = sphi 0, %s132
    $region4: #{tpu_custom_call.1} parent=1 // loop_header_branch
      %18 = sbr.rel (%p16) target = $region8
    $region5: #{tpu_custom_call.1} parent=1 // loop_body
      %s20 = ssub.s32 %s15, 1
      %s21 = ssub.s32 %s15, 2
      %s28 = sadd.s32 1, %s23
      %p29 = scmp.ge.s32.totalorder %s28, 3
      %s30 = scalar_select %p29, 0, %s28
      %s31 = sadd.s32 1, %s22
      %s32 = scalar_select %p29, %s31, %s22
      %p33 = scmp.ge.s32.totalorder %s32, 1
      %s34 = scalar_select %p33, 0, %s32
      %s35 = ssub.s32 %s22, %s34
      %s36 = ssub.s32 %s23, %s30
      %s37 = sor.u32 %s35, %s36
      %p38 = scmp.eq.s32.totalorder %s37, 0
      %s40 = sadd.s32 %s39, 1
      %s41 = scalar_select %p38, %s39, %s40
      %p44 = pneg %p38
      %p45 = scmp.eq.s32.totalorder %s15, 2
      %p46 = por %p44, %p45
      %p47 = scmp.ne.s32.totalorder %s39, %s42
      %p48 = scmp.eq.s32.totalorder %s15, 0
      %p49 = por %p47, %p48
      %p50 = scmp.ne.s32.totalorder %s39, %s42
      %p51 = scmp.eq.s32.totalorder %s20, 2
      %p52 = por %p50, %p51
      %p53 = scmp.ne.s32.totalorder %s42, %s43
      %p54 = scmp.eq.s32.totalorder %s20, 0
      %p55 = por %p53, %p54
      %p56 = scmp.ne.s32.totalorder %s42, %s43
      %p57 = scmp.eq.s32.totalorder %s21, 2
      %p58 = por %p56, %p57
      %p60 = scmp.ne.s32.totalorder %s43, %s59
      %p61 = scmp.eq.s32.totalorder %s21, 0
      %p62 = por %p60, %p61
      %s64 = sadd.s32 %s63, 1
      %p67 = scmp.eq.s32.totalorder %s15, 2
      %p68 = scmp.ne.s32.totalorder %s63, %s65
      %p69 = scmp.eq.s32.totalorder %s15, 0
      %p70 = por %p68, %p69
      %p71 = scmp.ne.s32.totalorder %s63, %s65
      %p72 = scmp.eq.s32.totalorder %s20, 2
      %p73 = por %p71, %p72
      %p74 = scmp.ne.s32.totalorder %s65, %s66
      %p75 = scmp.eq.s32.totalorder %s20, 0
      %p76 = por %p74, %p75
      %p77 = scmp.ne.s32.totalorder %s65, %s66
      %p78 = scmp.eq.s32.totalorder %s21, 2
      %p79 = por %p77, %p78
      %p81 = scmp.ne.s32.totalorder %s66, %s80
      %p82 = scmp.eq.s32.totalorder %s21, 0
      %p83 = por %p81, %p82
      %s85 = sadd.s32 %s84, 1
      %p88 = scmp.eq.s32.totalorder %s15, 2
      %p89 = scmp.ne.s32.totalorder %s84, %s86
      %p90 = scmp.eq.s32.totalorder %s15, 0
      %p91 = por %p89, %p90
      %p92 = scmp.ne.s32.totalorder %s84, %s86
      %p93 = scmp.eq.s32.totalorder %s20, 2
      %p94 = por %p92, %p93
      %p95 = scmp.ne.s32.totalorder %s86, %s87
      %p96 = scmp.eq.s32.totalorder %s20, 0
      %p97 = por %p95, %p96
      %p98 = scmp.ne.s32.totalorder %s86, %s87
      %p99 = scmp.eq.s32.totalorder %s21, 2
      %p100 = por %p98, %p99
      %p102 = scmp.ne.s32.totalorder %s87, %s101
      %p103 = scmp.eq.s32.totalorder %s21, 0
      %p104 = por %p102, %p103
      %s106 = sadd.s32 %s105, 1
      %p109 = scmp.eq.s32.totalorder %s15, 2
      %p110 = scmp.ne.s32.totalorder %s105, %s107
      %p111 = scmp.eq.s32.totalorder %s15, 0
      %p112 = por %p110, %p111
      %p113 = scmp.ne.s32.totalorder %s105, %s107
      %p114 = scmp.eq.s32.totalorder %s20, 2
      %p115 = por %p113, %p114
      %p116 = scmp.ne.s32.totalorder %s107, %s108
      %p117 = scmp.eq.s32.totalorder %s20, 0
      %p118 = por %p116, %p117
      %p119 = scmp.ne.s32.totalorder %s107, %s108
      %p120 = scmp.eq.s32.totalorder %s21, 2
      %p121 = por %p119, %p120
      %p123 = scmp.ne.s32.totalorder %s108, %s122
      %p124 = scmp.eq.s32.totalorder %s21, 0
      %p125 = por %p123, %p124
      %s126 = ssub.s32 %s22, %s34
      %p127 = scmp.eq.s32.totalorder %s126, 0
      %s129 = sadd.s32 %s128, 1
      %s130 = scalar_select %p127, %s128, %s129
      %p133 = pneg %p127
      %p134 = scmp.eq.s32.totalorder %s15, 2
      %p135 = por %p133, %p134
      %p136 = scmp.ne.s32.totalorder %s128, %s131
      %p137 = scmp.eq.s32.totalorder %s15, 0
      %p138 = por %p136, %p137
      %p139 = scmp.ne.s32.totalorder %s128, %s131
      %p140 = scmp.eq.s32.totalorder %s20, 2
      %p141 = por %p139, %p140
      %p142 = scmp.ne.s32.totalorder %s131, %s132
      %p143 = scmp.eq.s32.totalorder %s20, 0
      %p144 = por %p142, %p143
      %p145 = scmp.ne.s32.totalorder %s131, %s132
      %p146 = scmp.eq.s32.totalorder %s21, 2
      %p147 = por %p145, %p146
      %p149 = scmp.ne.s32.totalorder %s132, %s148
      %p150 = scmp.eq.s32.totalorder %s21, 0
      %p151 = por %p149, %p150
      %p152 = scmp.le.s32.totalorder 1, %s15
      %p153 = scmp.lt.s32.totalorder %s15, 4
      %p154 = pnand %p152, %p153
      %p155 = pneg %p154
      // Predicated region
      $region9: #{tpu_custom_call.1} parent=5 // pred_check
        _
      $region10: #{tpu_custom_call.1} parent=5 // pred_check_branch
        %157 = sbr.rel (%p154) target = $region12
      $region11: #{tpu_custom_call.1} parent=5 // pred_region
        %s158 = ssub.s32 %s15, 1
        // Predicated region
        $region13: #{tpu_custom_call.1} parent=11 // pred_check
          %p159 = pneg %p76
        $region14: #{tpu_custom_call.1} parent=11 // pred_check_branch
          %161 = sbr.rel (%p159) target = $region16
        $region15: #{tpu_custom_call.1} parent=11 // pred_region
          %s163 = ssub.s32 12288, 12288
          %164 = vsyncadd [#allocation7], %s163
          %s165 = sshll.u32 [#allocation6], 4
          %s166 = int_to_ptr.vmem [resolvable:$true] %s165
          %171 = dma.hbm_to_vmem [thread:$0]  %s1, 12288, %s166, [#allocation7], 128, 128, 8
        $region16: #{tpu_custom_call.1} parent=11 // pred_fallthru
          _
        // Predicated region
        $region17: #{tpu_custom_call.1} parent=11 // pred_check
          %p172 = pneg %p97
        $region18: #{tpu_custom_call.1} parent=11 // pred_check_branch
          %174 = sbr.rel (%p172) target = $region20
        $region19: #{tpu_custom_call.1} parent=11 // pred_region
          _
        $region20: #{tpu_custom_call.1} parent=11 // pred_fallthru
          _
        // Predicated region
        $region21: #{tpu_custom_call.1} parent=11 // pred_check
          %p175 = pneg %p118
        $region22: #{tpu_custom_call.1} parent=11 // pred_check_branch
          %177 = sbr.rel (%p175) target = $region24
        $region23: #{tpu_custom_call.1} parent=11 // pred_region
          _
        $region24: #{tpu_custom_call.1} parent=11 // pred_fallthru
          _
      $region12: #{tpu_custom_call.1} parent=5 // pred_fallthru
        _
      %p178 = scmp.lt.s32.totalorder %s15, 3
      // Predicated region
      $region25: #{tpu_custom_call.1} parent=5 // pred_check
        %p179 = pneg %p178
      $region26: #{tpu_custom_call.1} parent=5 // pred_check_branch
        %181 = sbr.rel (%p179) target = $region28
      $region27: #{tpu_custom_call.1} parent=5 // pred_region
        // Predicated region
        $region29: #{tpu_custom_call.1} parent=27 // pred_check
          %p182 = pneg %p49
        $region30: #{tpu_custom_call.1} parent=27 // pred_check_branch
          %184 = sbr.rel (%p182) target = $region32
        $region31: #{tpu_custom_call.1} parent=27 // pred_region
          %s185 = sand.u32 %s39, 1
          %s186 = scalar_lea.sflag [#allocation4], %s185
          %s187 = sand.u32 %s39, 1
          %s188 = smul.addr %s187, 32
          %s189 = scalar_lea.vmem [#allocation3], %s188
          %s190 = smul.u32 2, %s22
          %s191 = smul.u32 2, %s23
          %s193 = ssub.s32 512, 512
          %194 = vsyncadd %s186, %s193
          %s195 = smul.addr %s190, 6
          %s196 = sadd.s32 %s191, %s195
          %s197 = smul.addr %s196, 128
          %s198 = scalar_lea.hbm %s0, %s197
          %s199 = sshll.u32 %s189, 4
          %s200 = int_to_ptr.vmem [resolvable:$true] %s199
          %205 = dma.hbm_to_vmem [thread:$0]  %s198, 512, %s200, %s186, 768, 256, 16
        $region32: #{tpu_custom_call.1} parent=27 // pred_fallthru
          _
      $region28: #{tpu_custom_call.1} parent=5 // pred_fallthru
        _
      %p206 = scmp.le.s32.totalorder 1, %s15
      %p207 = scmp.lt.s32.totalorder %s15, 4
      %p208 = pnand %p206, %p207
      %p209 = pneg %p208
      // Predicated region
      $region33: #{tpu_custom_call.1} parent=5 // pred_check
        _
      $region34: #{tpu_custom_call.1} parent=5 // pred_check_branch
        %211 = sbr.rel (%p208) target = $region36
      $region35: #{tpu_custom_call.1} parent=5 // pred_region
        %s212 = ssub.s32 %s15, 1
        %s213 = sand.u32 %s42, 1
        %s214 = scalar_lea.sflag [#allocation4], %s213
        %s215 = sand.u32 %s42, 1
        %s216 = smul.addr %s215, 32
        %s217 = scalar_lea.vmem [#allocation3], %s216
        // Predicated region
        $region37: #{tpu_custom_call.1} parent=35 // pred_check
          %p218 = pneg %p55
        $region38: #{tpu_custom_call.1} parent=35 // pred_check_branch
          %220 = sbr.rel (%p218) target = $region40
        $region39: #{tpu_custom_call.1} parent=35 // pred_region
          %221 = dma.done %s214, 512
        $region40: #{tpu_custom_call.1} parent=35 // pred_fallthru
          _
        // Predicated region
        $region41: #{tpu_custom_call.1} parent=35 // pred_check
          %p222 = pneg %p76
        $region42: #{tpu_custom_call.1} parent=35 // pred_check_branch
          %224 = sbr.rel (%p222) target = $region44
        $region43: #{tpu_custom_call.1} parent=35 // pred_region
          %225 = dma.done [#allocation7], 12288
        $region44: #{tpu_custom_call.1} parent=35 // pred_fallthru
          _
        %s226 = sand.u32 %s42, 1
        %s227 = scalar_lea.sflag [#allocation4], %s226
        %s228 = sand.u32 %s42, 1
        %s229 = smul.addr %s228, 32
        %s230 = scalar_lea.vmem [#allocation3], %s229
        %p231 = pneg %p55
        %p232 = pneg %p52
        %p233 = pneg %p76
        %p234 = pneg %p73
        %p235 = pneg %p97
        %p236 = pneg %p94
        %p237 = pneg %p118
        %p238 = pneg %p115
        %p239 = pneg %p144
        %p240 = pneg %p141
        %s241 = smul.u32 2, %s24
        %s242 = smul.u32 2, %s25
        %p243 = scmp.eq.s32.totalorder %s25, 0
        // Predicated region
        $region45: #{tpu_custom_call.1} parent=35 // pred_check
          %p244 = pneg %p243
        $region46: #{tpu_custom_call.1} parent=35 // pred_check_branch
          %246 = sbr.rel (%p244) target = $region48
        $region47: #{tpu_custom_call.1} parent=35 // pred_region
          %247 = vst [vmem:[#allocation2] sm:$0xff] 0.0
          %248 = vst [vmem:[#allocation2 + $0x8] sm:$0xff] 0.0
        $region48: #{tpu_custom_call.1} parent=35 // pred_fallthru
          _
        %v249 = vld [vmem:[%s217] sm:$0xff]
        %v250 = vld [vmem:[%s217 + $0x8] sm:$0xff]
        %v251 = vld [vmem:[%s217 + $0x10] sm:$0xff]
        %v252 = vld [vmem:[%s217 + $0x18] sm:$0xff]
        %s253 = smul.u32 %s25, 256
        %s254 = scalar_lea.vmem [#allocation6], %s253
        %v255 = vld [vmem:[%s254] sm:$0xff]
        %v256 = vld [vmem:[%s254 + $0x8] sm:$0xff]
        %v257 = vld [vmem:[%s254 + $0x10] sm:$0xff]
        %v258 = vld [vmem:[%s254 + $0x18] sm:$0xff]
        %v259 = vld [vmem:[%s254 + $0x20] sm:$0xff]
        %v260 = vld [vmem:[%s254 + $0x28] sm:$0xff]
        %v261 = vld [vmem:[%s254 + $0x30] sm:$0xff]
        %v262 = vld [vmem:[%s254 + $0x38] sm:$0xff]
        %v263 = vld [vmem:[%s254 + $0x40] sm:$0xff]
        %v264 = vld [vmem:[%s254 + $0x48] sm:$0xff]
        %v265 = vld [vmem:[%s254 + $0x50] sm:$0xff]
        %v266 = vld [vmem:[%s254 + $0x58] sm:$0xff]
        %v267 = vld [vmem:[%s254 + $0x60] sm:$0xff]
        %v268 = vld [vmem:[%s254 + $0x68] sm:$0xff]
        %v269 = vld [vmem:[%s254 + $0x70] sm:$0xff]
        %v270 = vld [vmem:[%s254 + $0x78] sm:$0xff]
        %v271 = vld [vmem:[%s254 + $0x80] sm:$0xff]
        %v272 = vld [vmem:[%s254 + $0x88] sm:$0xff]
        %v273 = vld [vmem:[%s254 + $0x90] sm:$0xff]
        %v274 = vld [vmem:[%s254 + $0x98] sm:$0xff]
        %v275 = vld [vmem:[%s254 + $0xa0] sm:$0xff]
        %v276 = vld [vmem:[%s254 + $0xa8] sm:$0xff]
        %v277 = vld [vmem:[%s254 + $0xb0] sm:$0xff]
        %v278 = vld [vmem:[%s254 + $0xb8] sm:$0xff]
        %v279 = vld [vmem:[%s254 + $0xc0] sm:$0xff]
        %v280 = vld [vmem:[%s254 + $0xc8] sm:$0xff]
        %v281 = vld [vmem:[%s254 + $0xd0] sm:$0xff]
        %v282 = vld [vmem:[%s254 + $0xd8] sm:$0xff]
        %v283 = vld [vmem:[%s254 + $0xe0] sm:$0xff]
        %v284 = vld [vmem:[%s254 + $0xe8] sm:$0xff]
        %v285 = vld [vmem:[%s254 + $0xf0] sm:$0xff]
        %v286 = vld [vmem:[%s254 + $0xf8] sm:$0xff]
        %v287 = vld [vmem:[#allocation2] sm:$0xff]
        %v288 = vld [vmem:[#allocation2 + $0x8] sm:$0xff]
        %289 = vmatprep.subr.mxu0 0.0
        %290 = vmatpush1.msra.mxu0 %v255
        %291 = vmatprep.subr.mxu0 0.0
        %292 = vmatpush1.msra.mxu0 %v256
        %293 = vmatprep.subr.mxu0 0.0
        %294 = vmatpush1.msra.mxu0 %v257
        %295 = vmatprep.subr.mxu0 0.0
        %296 = vmatpush1.msra.mxu0 %v258
        %297 = vmatprep.subr.mxu0 0.0
        %298 = vmatpush1.msra.mxu0 %v259
        %299 = vmatprep.subr.mxu0 0.0
        %300 = vmatpush1.msra.mxu0 %v260
        %301 = vmatprep.subr.mxu0 0.0
        %302 = vmatpush1.msra.mxu0 %v261
        %303 = vmatprep.subr.mxu0 0.0
        %304 = vmatpush1.msra.mxu0 %v262
        %305 = vmatprep.subr.mxu0 0.0
        %306 = vmatpush1.msra.mxu0 %v263
        %307 = vmatprep.subr.mxu0 0.0
        %308 = vmatpush1.msra.mxu0 %v264
        %309 = vmatprep.subr.mxu0 0.0
        %310 = vmatpush1.msra.mxu0 %v265
        %311 = vmatprep.subr.mxu0 0.0
        %312 = vmatpush1.msra.mxu0 %v266
        %313 = vmatprep.subr.mxu0 0.0
        %314 = vmatpush1.msra.mxu0 %v267
        %315 = vmatprep.subr.mxu0 0.0
        %316 = vmatpush1.msra.mxu0 %v268
        %317 = vmatprep.subr.mxu0 0.0
        %318 = vmatpush1.msra.mxu0 %v269
        %319 = vmatprep.subr.mxu0 0.0
        %320 = vmatpush1.msra.mxu0 %v270
        %321 = vmatprep.subr.mxu0 0.0
        %322 = vmatpush1.msra.mxu0 %v271
        %323 = vmatprep.subr.mxu0 0.0
        %324 = vmatpush1.msra.mxu0 %v272
        %325 = vmatprep.subr.mxu0 0.0
        %326 = vmatpush1.msra.mxu0 %v273
        %327 = vmatprep.subr.mxu0 0.0
        %328 = vmatpush1.msra.mxu0 %v274
        %329 = vmatprep.subr.mxu0 0.0
        %330 = vmatpush1.msra.mxu0 %v275
        %331 = vmatprep.subr.mxu0 0.0
        %332 = vmatpush1.msra.mxu0 %v276
        %333 = vmatprep.subr.mxu0 0.0
        %334 = vmatpush1.msra.mxu0 %v277
        %335 = vmatprep.subr.mxu0 0.0
        %336 = vmatpush1.msra.mxu0 %v278
        %337 = vmatprep.subr.mxu0 0.0
        %338 = vmatpush1.msra.mxu0 %v279
        %339 = vmatprep.subr.mxu0 0.0
        %340 = vmatpush1.msra.mxu0 %v280
        %341 = vmatprep.subr.mxu0 0.0
        %342 = vmatpush1.msra.mxu0 %v281
        %343 = vmatprep.subr.mxu0 0.0
        %344 = vmatpush1.msra.mxu0 %v282
        %345 = vmatprep.subr.mxu0 0.0
        %346 = vmatpush1.msra.mxu0 %v283
        %347 = vmatprep.subr.mxu0 0.0
        %348 = vmatpush1.msra.mxu0 %v284
        %349 = vmatprep.subr.mxu0 0.0
        %350 = vmatpush1.msra.mxu0 %v285
        %351 = vmatprep.subr.mxu0 0.0
        %352 = vmatpush1.msra.mxu0 %v286
        %353 = vmatprep.mubr.f32.mxu0 %v250
        %354 = vmatmul.mubr.f32.gmra.mrb[0].mxu0 %v249
        %v355 = vpop.f32.mrb[0].mxu0
        %v356 = vadd.f32 0.0, %v355
        %v357 = vpop.f32.mrb[0].mxu0
        %358 = vmatprep.mubr.f32.mxu0 %v252
        %359 = vmatmul.mubr.f32.gmra.mrb[0].mxu0 %v251
        %v360 = vpop.f32.mrb[0].mxu0
        %v361 = vadd.f32 0.0, %v360
        %v362 = vpop.f32.mrb[0].mxu0
        %363 = vdwg.mxu0
        %v364 = vadd.f32 %v287, %v356
        %v365 = vadd.f32 %v288, %v361
        %366 = vst [vmem:[#allocation2] sm:$0xff] %v364
        %367 = vst [vmem:[#allocation2 + $0x8] sm:$0xff] %v365
        %p368 = scmp.eq.s32.totalorder %s25, 2
        // Predicated region
        $region49: #{tpu_custom_call.1} parent=35 // pred_check
          %p369 = pneg %p368
        $region50: #{tpu_custom_call.1} parent=35 // pred_check_branch
          %371 = sbr.rel (%p369) target = $region52
        $region51: #{tpu_custom_call.1} parent=35 // pred_region
          %v372 = vld [vmem:[#allocation2] sm:$0xff]
          %v373 = vld [vmem:[#allocation2 + $0x8] sm:$0xff]
          %v374 = vld [vmem:[%s3] sm:$0x1]
          %v376 = vlaneseq
          %v377 = vshrl.u32 %v376, 7
          %v378 = vsub.s32 0, %v377
          %v379 = vrot.slane %v374, %v378
          %v381 = vmul.f32 %v372, %v379
          %v382 = vmul.f32 %v373, %v379
          %383 = vadd.xlane.f32.xlu0 %v381
          %v384 = vpop.xlane.xlu0 %383
          %385 = vadd.xlane.f32.xlu0 %v382
          %v386 = vpop.xlane.xlu0 %385
          %v387 = vadd.f32 %v384, 1e-09
          %v388 = vadd.f32 %v386, 1e-09
          %v389 = vmax.f32 %v387, %v388
          %v390 = vrot.slane %v389, 4
          %v391 = vmax.f32 %v389, %v390
          %v392 = vrot.slane %v391, 2
          %v393 = vmax.f32 %v391, %v392
          %v394 = vrot.slane %v393, 1
          %v395 = vmax.f32 %v393, %v394
          %s396 = vtos %v395
          %v397 = vstv %s396
          %v398 = vsub.f32 %v387, %v397
          %v399 = vsub.f32 %v388, %v397
          %v400 = vmul.f32 %v398, 1.442695
          %v401 = vpow.pop %v400
          %v402 = vmul.f32 %v399, 1.442695
          %v403 = vpow.pop %v402
          %v404 = vlaneseq
          %v405 = vshrl.u32 %v404, 7
          %v406 = vlaneseq
          %v407 = vand.u32 %v406, 127
          %v408 = vmul.u32 %v405, 8
          %vm409 = vcmp.ge.s32.totalorder %v407, %v408
          %v410 = vadd.s32 %v408, 8
          %vm411 = vcmp.lt.s32.totalorder %v407, %v410
          %vm412 = vmand %vm409, %vm411
          %v413 = vsel %vm412, 1, 0
          %v414 = vcvt.s32.f32 %v413
          %v415 = vmul.f32 %v401, %v372
          %v416 = vmul.f32 %v403, %v373
          %vm417 = vcmask 130048
          %v419 = vsel %vm417, %v414, 0
          %421 = vmatprep.subr.mxu0 0.0
          %422 = vmatpush1.msra.mxu0 %v415
          %423 = vmatprep.subr.mxu0 0.0
          %424 = vmatpush1.msra.mxu0 %v416
          %425 = vmatprep.subr.mxu0 0.0
          %426 = vmatpush1.msra.mxu0 0.0
          %427 = vmatprep.subr.mxu0 0.0
          %428 = vmatpush1.msra.mxu0 0.0
          %429 = vmatprep.subr.mxu0 0.0
          %430 = vmatpush1.msra.mxu0 0.0
          %431 = vmatprep.subr.mxu0 0.0
          %432 = vmatpush1.msra.mxu0 0.0
          %433 = vmatprep.subr.mxu0 0.0
          %434 = vmatpush1.msra.mxu0 0.0
          %435 = vmatprep.subr.mxu0 0.0
          %436 = vmatpush1.msra.mxu0 0.0
          %437 = vmatprep.subr.mxu0 0.0
          %438 = vmatpush1.msra.mxu0 0.0
          %439 = vmatprep.subr.mxu0 0.0
          %440 = vmatpush1.msra.mxu0 0.0
          %441 = vmatprep.subr.mxu0 0.0
          %442 = vmatpush1.msra.mxu0 0.0
          %443 = vmatprep.subr.mxu0 0.0
          %444 = vmatpush1.msra.mxu0 0.0
          %445 = vmatprep.subr.mxu0 0.0
          %446 = vmatpush1.msra.mxu0 0.0
          %447 = vmatprep.subr.mxu0 0.0
          %448 = vmatpush1.msra.mxu0 0.0
          %449 = vmatprep.subr.mxu0 0.0
          %450 = vmatpush1.msra.mxu0 0.0
          %451 = vmatprep.subr.mxu0 0.0
          %452 = vmatpush1.msra.mxu0 0.0
          %453 = vmatprep.subr.mxu0 0.0
          %454 = vmatpush1.msra.mxu0 0.0
          %455 = vmatprep.subr.mxu0 0.0
          %456 = vmatpush1.msra.mxu0 0.0
          %457 = vmatprep.subr.mxu0 0.0
          %458 = vmatpush1.msra.mxu0 0.0
          %459 = vmatprep.subr.mxu0 0.0
          %460 = vmatpush1.msra.mxu0 0.0
          %461 = vmatprep.subr.mxu0 0.0
          %462 = vmatpush1.msra.mxu0 0.0
          %463 = vmatprep.subr.mxu0 0.0
          %464 = vmatpush1.msra.mxu0 0.0
          %465 = vmatprep.subr.mxu0 0.0
          %466 = vmatpush1.msra.mxu0 0.0
          %467 = vmatprep.subr.mxu0 0.0
          %468 = vmatpush1.msra.mxu0 0.0
          %469 = vmatprep.subr.mxu0 0.0
          %470 = vmatpush1.msra.mxu0 0.0
          %471 = vmatprep.subr.mxu0 0.0
          %472 = vmatpush1.msra.mxu0 0.0
          %473 = vmatprep.subr.mxu0 0.0
          %474 = vmatpush1.msra.mxu0 0.0
          %475 = vmatprep.subr.mxu0 0.0
          %476 = vmatpush1.msra.mxu0 0.0
          %477 = vmatprep.subr.mxu0 0.0
          %478 = vmatpush1.msra.mxu0 0.0
          %479 = vmatprep.subr.mxu0 0.0
          %480 = vmatpush1.msra.mxu0 0.0
          %481 = vmatprep.subr.mxu0 0.0
          %482 = vmatpush1.msra.mxu0 0.0
          %483 = vmatprep.subr.mxu0 0.0
          %484 = vmatpush1.msra.mxu0 0.0
          %485 = vmatprep.mubr.f32.mxu0 0.0
          %486 = vmatmul.mubr.f32.gmra.mrb[0].mxu0 %v419
          %v487 = vpop.f32.mrb[0].mxu0
          %v488 = vadd.f32 0.0, %v487
          %v489 = vpop.f32.mrb[0].mxu0
          %490 = vdwg.mxu0
          %491 = vmatprep.subr.mxu0 0.0
          %492 = vmatpush1.msra.mxu0 %v401
          %493 = vmatprep.subr.mxu0 0.0
          %494 = vmatpush1.msra.mxu0 %v403
          %495 = vmatprep.subr.mxu0 0.0
          %496 = vmatpush1.msra.mxu0 0.0
          %497 = vmatprep.subr.mxu0 0.0
          %498 = vmatpush1.msra.mxu0 0.0
          %499 = vmatprep.subr.mxu0 0.0
          %500 = vmatpush1.msra.mxu0 0.0
          %501 = vmatprep.subr.mxu0 0.0
          %502 = vmatpush1.msra.mxu0 0.0
          %503 = vmatprep.subr.mxu0 0.0
          %504 = vmatpush1.msra.mxu0 0.0
          %505 = vmatprep.subr.mxu0 0.0
          %506 = vmatpush1.msra.mxu0 0.0
          %507 = vmatprep.subr.mxu0 0.0
          %508 = vmatpush1.msra.mxu0 0.0
          %509 = vmatprep.subr.mxu0 0.0
          %510 = vmatpush1.msra.mxu0 0.0
          %511 = vmatprep.subr.mxu0 0.0
          %512 = vmatpush1.msra.mxu0 0.0
          %513 = vmatprep.subr.mxu0 0.0
          %514 = vmatpush1.msra.mxu0 0.0
          %515 = vmatprep.subr.mxu0 0.0
          %516 = vmatpush1.msra.mxu0 0.0
          %517 = vmatprep.subr.mxu0 0.0
          %518 = vmatpush1.msra.mxu0 0.0
          %519 = vmatprep.subr.mxu0 0.0
          %520 = vmatpush1.msra.mxu0 0.0
          %521 = vmatprep.subr.mxu0 0.0
          %522 = vmatpush1.msra.mxu0 0.0
          %523 = vmatprep.subr.mxu0 0.0
          %524 = vmatpush1.msra.mxu0 0.0
          %525 = vmatprep.subr.mxu0 0.0
          %526 = vmatpush1.msra.mxu0 0.0
          %527 = vmatprep.subr.mxu0 0.0
          %528 = vmatpush1.msra.mxu0 0.0
          %529 = vmatprep.subr.mxu0 0.0
          %530 = vmatpush1.msra.mxu0 0.0
          %531 = vmatprep.subr.mxu0 0.0
          %532 = vmatpush1.msra.mxu0 0.0
          %533 = vmatprep.subr.mxu0 0.0
          %534 = vmatpush1.msra.mxu0 0.0
          %535 = vmatprep.subr.mxu0 0.0
          %536 = vmatpush1.msra.mxu0 0.0
          %537 = vmatprep.subr.mxu0 0.0
          %538 = vmatpush1.msra.mxu0 0.0
          %539 = vmatprep.subr.mxu0 0.0
          %540 = vmatpush1.msra.mxu0 0.0
          %541 = vmatprep.subr.mxu0 0.0
          %542 = vmatpush1.msra.mxu0 0.0
          %543 = vmatprep.subr.mxu0 0.0
          %544 = vmatpush1.msra.mxu0 0.0
          %545 = vmatprep.subr.mxu0 0.0
          %546 = vmatpush1.msra.mxu0 0.0
          %547 = vmatprep.subr.mxu0 0.0
          %548 = vmatpush1.msra.mxu0 0.0
          %549 = vmatprep.subr.mxu0 0.0
          %550 = vmatpush1.msra.mxu0 0.0
          %551 = vmatprep.subr.mxu0 0.0
          %552 = vmatpush1.msra.mxu0 0.0
          %553 = vmatprep.subr.mxu0 0.0
          %554 = vmatpush1.msra.mxu0 0.0
          %555 = vmatprep.mubr.f32.mxu0 0.0
          %556 = vmatmul.mubr.f32.gmra.mrb[0].mxu0 %v419
          %v557 = vpop.f32.mrb[0].mxu0
          %v558 = vadd.f32 0.0, %v557
          %v559 = vpop.f32.mrb[0].mxu0
          %560 = vdwg.mxu0
          %562 = vset.pattern.permute.xlu0 0
          %563 = vperm.xlu0 %562, %v558
          %v564 = vpop.permute.xlu0 %563
          %v566 = vrcp.pop %v564
          %v567 = vmul.f32 %v488, %v566
          %v568 = vld [vmem:[%s2] sm:$0x1]
          %v570 = vlaneseq
          %v571 = vshrl.u32 %v570, 7
          %v572 = vsub.s32 0, %v571
          %v573 = vrot.slane %v568, %v572
          %v575 = vadd.f32 %v567, %v573
          %576 = vst [vmem:[#allocation8] sm:$0x3] %v575
        $region52: #{tpu_custom_call.1} parent=35 // pred_fallthru
          _
        // Predicated region
        $region53: #{tpu_custom_call.1} parent=35 // pred_check
          %p577 = pneg %p141
        $region54: #{tpu_custom_call.1} parent=35 // pred_check_branch
          %579 = sbr.rel (%p577) target = $region56
        $region55: #{tpu_custom_call.1} parent=35 // pred_region
          %s581 = ssub.s32 32, 32
          %582 = vsyncadd [#allocation5], %s581
          %s583 = smul.addr %s24, 32
          %s584 = scalar_lea.hbm %s4, %s583
          %s586 = sshll.u32 [#allocation8], 4
          %s587 = int_to_ptr.vmem [resolvable:$true] %s586
          %589 = dma.vmem_to_hbm [thread:$0]  %s587, 32, %s584, [#allocation5]
        $region56: #{tpu_custom_call.1} parent=35 // pred_fallthru
          _
        // Predicated region
        $region57: #{tpu_custom_call.1} parent=35 // pred_check
          %p590 = pneg %p141
        $region58: #{tpu_custom_call.1} parent=35 // pred_check_branch
          %592 = sbr.rel (%p590) target = $region60
        $region59: #{tpu_custom_call.1} parent=35 // pred_region
          %593 = dma.done [#allocation5], 32
        $region60: #{tpu_custom_call.1} parent=35 // pred_fallthru
          _
      $region36: #{tpu_custom_call.1} parent=5 // pred_fallthru
        _
      %p594 = scmp.le.s32.totalorder 2, %s15
      // Predicated region
      $region61: #{tpu_custom_call.1} parent=5 // pred_check
        %p595 = pneg %p594
      $region62: #{tpu_custom_call.1} parent=5 // pred_check_branch
        %597 = sbr.rel (%p595) target = $region64
      $region63: #{tpu_custom_call.1} parent=5 // pred_region
        %s598 = ssub.s32 %s15, 2
      $region64: #{tpu_custom_call.1} parent=5 // pred_fallthru
        _
    $region6: #{tpu_custom_call.1} parent=1 // loop_footer
      %s19 = sadd.s32 1, %s15
    $region7: #{tpu_custom_call.1} parent=1 // loop_footer_branch
      %14 = sbr.rel target = $region3
    $region8: #{tpu_custom_call.1} parent=1 // loop_exit
      _
    %599 = vsyncpa [#allocation4], 1
    %s600 = scalar_lea.sflag [#allocation4], 1
    %601 = vsyncpa %s600, 1
    %602 = vsyncpa [#allocation7], 1
    %603 = vsyncpa [#allocation5], 1
    %s604 = scalar_lea.sflag [#allocation5], 1
    %605 = vsyncpa %s604, 1

</llo_original>
